<compile_context>
chip_gen: v5e
topology: v5e:2x2
jax: 0.10.0
libtpu: 0.0.40
codegen_flags: <defaults>
</compile_context>

<pallas_src>
import jax
import jax.numpy as jnp
import numpy as np
from jax.experimental import pallas as pl
from jax.experimental.pallas import tpu as pltpu


# ----------------------------------------------------------------------------
# Pallas kernel: whole MLP forward for one batch tile.
# ----------------------------------------------------------------------------
def mlp_kernel(x_ref, w1_ref, b1_ref, w2_ref, b2_ref, w3_ref, b3_ref, out_ref):
    h = jnp.dot(x_ref[...], w1_ref[...], preferred_element_type=jnp.float32)
    h = jnp.maximum(h + b1_ref[...], 0.0)
    h = jnp.dot(h, w2_ref[...], preferred_element_type=jnp.float32)
    h = jnp.maximum(h + b2_ref[...], 0.0)
    out_ref[...] = (jnp.dot(h, w3_ref[...], preferred_element_type=jnp.float32)
                    + b3_ref[...])


# ----------------------------------------------------------------------------
# Parameter init (PyTorch nn.Linear-style uniform init, deterministic).
# ----------------------------------------------------------------------------
def init_params(key, n_samples, hidden_sizes, n_classes):
    n_out = n_classes if n_classes > 2 else 1
    h1, h2 = hidden_sizes
    ks = jax.random.split(key, 6)

    def lin(kw, kb, fan_in, fan_out):
        bound = 1.0 / np.sqrt(fan_in)
        w = jax.random.uniform(kw, (fan_out, fan_in), jnp.float32, -bound, bound)
        b = jax.random.uniform(kb, (fan_out,), jnp.float32, -bound, bound)
        return w, b

    w1, b1 = lin(ks[0], ks[1], n_samples, h1)
    w2, b2 = lin(ks[2], ks[3], h1, h2)
    w3, b3 = lin(ks[4], ks[5], h2, n_out)
    return dict(w1=w1, b1=b1, w2=w2, b2=b2, w3=w3, b3=b3)


# ----------------------------------------------------------------------------
# Glue: replicate the PyTorch forward() reshape/squeeze, then pallas_call.
# ----------------------------------------------------------------------------
def _flatten_like_torch(x):
    # forward(): x.view(B, -1) if ndim > 2, then x.squeeze(dim=1)
    if x.ndim > 2:
        x = x.reshape(x.shape[0], -1)
    if x.ndim >= 2 and x.shape[1] == 1:
        x = jnp.squeeze(x, axis=1)
    return x


def mlp_pallas(x, p, *, block_b=128):
    x = _flatten_like_torch(x).astype(jnp.float32)
    B, n_samples = x.shape
    n_out = p['w3'].shape[0]

    # Pre-transpose weights to (in, out) so the kernel is plain x @ W + b.
    w1 = jnp.transpose(p['w1'])
    w2 = jnp.transpose(p['w2'])
    w3 = jnp.transpose(p['w3'])
    b1 = p['b1'][None, :]
    b2 = p['b2'][None, :]
    b3 = p['b3'][None, :]

    # Batch tile: sublane-aligned (multiple of 8), up to 128 rows per step.
    bb = min(block_b, max(8, ((B + 7) // 8) * 8))
    Bp = ((B + bb - 1) // bb) * bb
    if Bp != B:
        x = jnp.pad(x, ((0, Bp - B), (0, 0)))

    def rep(arr):
        nd = arr.ndim
        return pl.BlockSpec(arr.shape, lambda i, _n=nd: (0,) * _n)

    out = pl.pallas_call(
        mlp_kernel,
        out_shape=jax.ShapeDtypeStruct((Bp, n_out), jnp.float32),
        grid_spec=pltpu.PrefetchScalarGridSpec(
            num_scalar_prefetch=0,
            grid=(Bp // bb,),
            in_specs=[pl.BlockSpec((bb, n_samples), lambda i: (i, 0)),
                      rep(w1), rep(b1), rep(w2), rep(b2), rep(w3), rep(b3)],
            out_specs=pl.BlockSpec((bb, n_out), lambda i: (i, 0)),
        ),
        compiler_params=pltpu.CompilerParams(
            dimension_semantics=("parallel",)),   # megacore sharding on v7x
    )(x, w1, b1, w2, b2, w3, b3)
    return out[:B]


# ----------------------------------------------------------------------------
# Pure-JAX reference for verification.
# ----------------------------------------------------------------------------
def mlp_reference(x, p):
    x = _flatten_like_torch(x).astype(jnp.float32)
    h = jnp.maximum(x @ p['w1'].T + p['b1'], 0.0)
    h = jnp.maximum(h @ p['w2'].T + p['b2'], 0.0)
    return h @ p['w3'].T + p['b3']


if __name__ == "__main__":
    # Small shapes consistent with the module.
    B, n_samples, hidden_sizes, n_classes = 2, 128, (64, 32), 4

    key = jax.random.PRNGKey(0)
    kx, kp = jax.random.split(key)
    # 3-D input exercises the view(B, -1) path of the PyTorch forward().
    x = jax.random.normal(kx, (B, 1, n_samples), dtype=jnp.float32)
    params = init_params(kp, n_samples, hidden_sizes, n_classes)

    out = mlp_pallas(x, params)
    out = jax.block_until_ready(out)

    ref = mlp_reference(x, params)
    np.testing.assert_allclose(np.asarray(out), np.asarray(ref),
                               rtol=1e-4, atol=1e-4)
    print("KERNEL_OK")
</pallas_src>

<mosaic_0001>
module attributes {stable_mosaic.version = 11 : i64} {
  func.func @mlp_kernel(%arg0: i32, %arg1: memref<8x128xf32, #tpu.memory_space<vmem>>, %arg2: memref<128x64xf32, #tpu.memory_space<vmem>>, %arg3: memref<1x64xf32, #tpu.memory_space<vmem>>, %arg4: memref<64x32xf32, #tpu.memory_space<vmem>>, %arg5: memref<1x32xf32, #tpu.memory_space<vmem>>, %arg6: memref<32x4xf32, #tpu.memory_space<vmem>>, %arg7: memref<1x4xf32, #tpu.memory_space<vmem>>, %arg8: memref<8x4xf32, #tpu.memory_space<vmem>>) attributes {dimension_semantics = [#tpu.dimension_semantics<parallel>], iteration_bounds = array<i64: 1>, scalar_prefetch = 0 : i64, scratch_operands = 0 : i64, tpu.core_type = #tpu.core_type<tc>, window_params = [{transform_indices = @transform_0, window_bounds = array<i64: 8, 128>}, {pipeline_mode = #tpu.pipeline_mode<synchronous>, transform_indices = @transform_1, window_bounds = array<i64: 128, 64>}, {pipeline_mode = #tpu.pipeline_mode<synchronous>, transform_indices = @transform_2, window_bounds = array<i64: 1, 64>}, {pipeline_mode = #tpu.pipeline_mode<synchronous>, transform_indices = @transform_3, window_bounds = array<i64: 64, 32>}, {pipeline_mode = #tpu.pipeline_mode<synchronous>, transform_indices = @transform_4, window_bounds = array<i64: 1, 32>}, {pipeline_mode = #tpu.pipeline_mode<synchronous>, transform_indices = @transform_5, window_bounds = array<i64: 32, 4>}, {pipeline_mode = #tpu.pipeline_mode<synchronous>, transform_indices = @transform_6, window_bounds = array<i64: 1, 4>}, {transform_indices = @transform_7, window_bounds = array<i64: 8, 4>}]} {
    %c0 = arith.constant 0 : index
    %c0_0 = arith.constant 0 : index
    %0 = vector.load %arg1[%c0, %c0_0] : memref<8x128xf32, #tpu.memory_space<vmem>>, vector<8x128xf32>
    %c0_1 = arith.constant 0 : index
    %c0_2 = arith.constant 0 : index
    %1 = vector.load %arg2[%c0_1, %c0_2] : memref<128x64xf32, #tpu.memory_space<vmem>>, vector<128x64xf32>
    %cst = arith.constant dense<0.000000e+00> : vector<8x64xf32>
    %2 = tpu.matmul %0, %1, %cst {dimension_numbers = #tpu.dot_dimension_numbers<[1], [0], [0], [1], [0, 0, 1, 1], [], []>} : vector<8x128xf32>, vector<128x64xf32>, vector<8x64xf32> -> vector<8x64xf32>
    %c0_3 = arith.constant 0 : index
    %c0_4 = arith.constant 0 : index
    %3 = vector.load %arg3[%c0_3, %c0_4] : memref<1x64xf32, #tpu.memory_space<vmem>>, vector<1x64xf32>
    %4 = vector.broadcast %3 : vector<1x64xf32> to vector<8x64xf32>
    %5 = arith.addf %2, %4 : vector<8x64xf32>
    %cst_5 = arith.constant 0.000000e+00 : f32
    %6 = vector.broadcast %cst_5 : f32 to vector<8x64xf32>
    %7 = arith.maximumf %5, %6 : vector<8x64xf32>
    %c0_6 = arith.constant 0 : index
    %c0_7 = arith.constant 0 : index
    %8 = vector.load %arg4[%c0_6, %c0_7] : memref<64x32xf32, #tpu.memory_space<vmem>>, vector<64x32xf32>
    %cst_8 = arith.constant dense<0.000000e+00> : vector<8x32xf32>
    %9 = tpu.matmul %7, %8, %cst_8 {dimension_numbers = #tpu.dot_dimension_numbers<[1], [0], [0], [1], [0, 0, 1, 1], [], []>} : vector<8x64xf32>, vector<64x32xf32>, vector<8x32xf32> -> vector<8x32xf32>
    %c0_9 = arith.constant 0 : index
    %c0_10 = arith.constant 0 : index
    %10 = vector.load %arg5[%c0_9, %c0_10] : memref<1x32xf32, #tpu.memory_space<vmem>>, vector<1x32xf32>
    %11 = vector.broadcast %10 : vector<1x32xf32> to vector<8x32xf32>
    %12 = arith.addf %9, %11 : vector<8x32xf32>
    %cst_11 = arith.constant 0.000000e+00 : f32
    %13 = vector.broadcast %cst_11 : f32 to vector<8x32xf32>
    %14 = arith.maximumf %12, %13 : vector<8x32xf32>
    %c0_12 = arith.constant 0 : index
    %c0_13 = arith.constant 0 : index
    %15 = vector.load %arg6[%c0_12, %c0_13] : memref<32x4xf32, #tpu.memory_space<vmem>>, vector<32x4xf32>
    %cst_14 = arith.constant dense<0.000000e+00> : vector<8x4xf32>
    %16 = tpu.matmul %14, %15, %cst_14 {dimension_numbers = #tpu.dot_dimension_numbers<[1], [0], [0], [1], [0, 0, 1, 1], [], []>} : vector<8x32xf32>, vector<32x4xf32>, vector<8x4xf32> -> vector<8x4xf32>
    %c0_15 = arith.constant 0 : index
    %c0_16 = arith.constant 0 : index
    %17 = vector.load %arg7[%c0_15, %c0_16] : memref<1x4xf32, #tpu.memory_space<vmem>>, vector<1x4xf32>
    %18 = vector.broadcast %17 : vector<1x4xf32> to vector<8x4xf32>
    %19 = arith.addf %16, %18 : vector<8x4xf32>
    %c0_17 = arith.constant 0 : index
    %c0_18 = arith.constant 0 : index
    %20 = vector.load %arg8[%c0_17, %c0_18] : memref<8x4xf32, #tpu.memory_space<vmem>>, vector<8x4xf32>
    tpu.vector_store %arg8[%c0_17, %c0_18], %19 {strides = array<i32>} : memref<8x4xf32, #tpu.memory_space<vmem>>, vector<8x4xf32>,
    return
  }
  func.func @transform_0(%arg0: i32) -> (i32, i32) {
    %c0_i32 = arith.constant 0 : i32
    %c0_i32_0 = arith.constant 0 : i32
    return %arg0, %c0_i32 : i32, i32
  }
  func.func @transform_1(%arg0: i32) -> (i32, i32) {
    %c0_i32 = arith.constant 0 : i32
    %c0_i32_0 = arith.constant 0 : i32
    %c0_i32_1 = arith.constant 0 : i32
    return %c0_i32, %c0_i32_0 : i32, i32
  }
  func.func @transform_2(%arg0: i32) -> (i32, i32) {
    %c0_i32 = arith.constant 0 : i32
    %c0_i32_0 = arith.constant 0 : i32
    %c0_i32_1 = arith.constant 0 : i32
    return %c0_i32, %c0_i32_0 : i32, i32
  }
  func.func @transform_3(%arg0: i32) -> (i32, i32) {
    %c0_i32 = arith.constant 0 : i32
    %c0_i32_0 = arith.constant 0 : i32
    %c0_i32_1 = arith.constant 0 : i32
    return %c0_i32, %c0_i32_0 : i32, i32
  }
  func.func @transform_4(%arg0: i32) -> (i32, i32) {
    %c0_i32 = arith.constant 0 : i32
    %c0_i32_0 = arith.constant 0 : i32
    %c0_i32_1 = arith.constant 0 : i32
    return %c0_i32, %c0_i32_0 : i32, i32
  }
  func.func @transform_5(%arg0: i32) -> (i32, i32) {
    %c0_i32 = arith.constant 0 : i32
    %c0_i32_0 = arith.constant 0 : i32
    %c0_i32_1 = arith.constant 0 : i32
    return %c0_i32, %c0_i32_0 : i32, i32
  }
  func.func @transform_6(%arg0: i32) -> (i32, i32) {
    %c0_i32 = arith.constant 0 : i32
    %c0_i32_0 = arith.constant 0 : i32
    %c0_i32_1 = arith.constant 0 : i32
    return %c0_i32, %c0_i32_0 : i32, i32
  }
  func.func @transform_7(%arg0: i32) -> (i32, i32) {
    %c0_i32 = arith.constant 0 : i32
    %c0_i32_0 = arith.constant 0 : i32
    return %arg0, %c0_i32 : i32, i32
  }
}

</mosaic_0001>

<llo_original>
// kernel: tpu_custom_call.1
$region0: #{tpu_custom_call.1}
  #allocation0 [shape = 'u32[]', space=smem, size = 0x4, offset = 0x4, fixed_abs, tag = 'smem constant byte address 0x4 - core index']
  #allocation1 [shape = 'u32[72,128]{1,0:T(1,128)}', space=vmem, size = 0x9000, scoped, tag = 'internal scratch']
  %s0 = inlined_call_operand.vmem [shape: f32[8,128], index: 0, kind: input, shape index: {}]
  %s1 = inlined_call_operand.vmem [shape: f32[128,64], index: 1, kind: input, shape index: {}]
  %s2 = inlined_call_operand.vmem [shape: f32[1,64], index: 2, kind: input, shape index: {}]
  %s3 = inlined_call_operand.vmem [shape: f32[64,32], index: 3, kind: input, shape index: {}]
  %s4 = inlined_call_operand.vmem [shape: f32[1,32], index: 4, kind: input, shape index: {}]
  %s5 = inlined_call_operand.vmem [shape: f32[32,4], index: 5, kind: input, shape index: {}]
  %s6 = inlined_call_operand.vmem [shape: f32[1,4], index: 6, kind: input, shape index: {}]
  %s7 = inlined_call_operand.vmem [shape: f32[8,4], index: 7, kind: output, shape index: {}]
  %s8 = sld [smem:[#allocation0]]
  $region38: #{tpu_custom_call.1} parent=0
    _
  %s10 = ssub.s32 1, %s8
  %s11 = scalar_select 0, %s10, %s8
  // Predicated region
  $region2: #{tpu_custom_call.1} parent=0 // pred_check
    _
  $region3: #{tpu_custom_call.1} parent=0 // pred_check_branch
    %13 = sbr.rel (0) target = $region5
  $region4: #{tpu_custom_call.1} parent=0 // pred_region
    _
  $region5: #{tpu_custom_call.1} parent=0 // pred_fallthru
    _
  // Predicated region
  $region6: #{tpu_custom_call.1} parent=0 // pred_check
    _
  $region7: #{tpu_custom_call.1} parent=0 // pred_check_branch
    %15 = sbr.rel (0) target = $region9
  $region8: #{tpu_custom_call.1} parent=0 // pred_region
    _
  $region9: #{tpu_custom_call.1} parent=0 // pred_fallthru
    _
  // Predicated region
  $region10: #{tpu_custom_call.1} parent=0 // pred_check
    _
  $region11: #{tpu_custom_call.1} parent=0 // pred_check_branch
    %17 = sbr.rel (0) target = $region13
  $region12: #{tpu_custom_call.1} parent=0 // pred_region
    _
  $region13: #{tpu_custom_call.1} parent=0 // pred_fallthru
    _
  // Predicated region
  $region14: #{tpu_custom_call.1} parent=0 // pred_check
    _
  $region15: #{tpu_custom_call.1} parent=0 // pred_check_branch
    %19 = sbr.rel (0) target = $region17
  $region16: #{tpu_custom_call.1} parent=0 // pred_region
    _
  $region17: #{tpu_custom_call.1} parent=0 // pred_fallthru
    _
  // Predicated region
  $region18: #{tpu_custom_call.1} parent=0 // pred_check
    _
  $region19: #{tpu_custom_call.1} parent=0 // pred_check_branch
    %21 = sbr.rel (0) target = $region21
  $region20: #{tpu_custom_call.1} parent=0 // pred_region
    _
  $region21: #{tpu_custom_call.1} parent=0 // pred_fallthru
    _
  // Predicated region
  $region22: #{tpu_custom_call.1} parent=0 // pred_check
    _
  $region23: #{tpu_custom_call.1} parent=0 // pred_check_branch
    %23 = sbr.rel (0) target = $region25
  $region24: #{tpu_custom_call.1} parent=0 // pred_region
    _
  $region25: #{tpu_custom_call.1} parent=0 // pred_fallthru
    _
  // Predicated region
  $region26: #{tpu_custom_call.1} parent=0 // pred_check
    _
  $region27: #{tpu_custom_call.1} parent=0 // pred_check_branch
    %25 = sbr.rel (0) target = $region29
  $region28: #{tpu_custom_call.1} parent=0 // pred_region
    _
  $region29: #{tpu_custom_call.1} parent=0 // pred_fallthru
    _
  %v26 = vld [vmem:[%s0] sm:$0xff]
  %v27 = vld [vmem:[%s1] sm:$0xff]
  %v28 = vld [vmem:[%s1 + $0x8] sm:$0xff]
  %v29 = vld [vmem:[%s1 + $0x10] sm:$0xff]
  %v30 = vld [vmem:[%s1 + $0x18] sm:$0xff]
  %v31 = vld [vmem:[%s1 + $0x20] sm:$0xff]
  %v32 = vld [vmem:[%s1 + $0x28] sm:$0xff]
  %v33 = vld [vmem:[%s1 + $0x30] sm:$0xff]
  %v34 = vld [vmem:[%s1 + $0x38] sm:$0xff]
  %v35 = vld [vmem:[%s1 + $0x40] sm:$0xff]
  %v36 = vld [vmem:[%s1 + $0x48] sm:$0xff]
  %v37 = vld [vmem:[%s1 + $0x50] sm:$0xff]
  %v38 = vld [vmem:[%s1 + $0x58] sm:$0xff]
  %v39 = vld [vmem:[%s1 + $0x60] sm:$0xff]
  %v40 = vld [vmem:[%s1 + $0x68] sm:$0xff]
  %v41 = vld [vmem:[%s1 + $0x70] sm:$0xff]
  %v42 = vld [vmem:[%s1 + $0x78] sm:$0xff]
  %v43 = vld [vmem:[%s2] sm:$0x1]
  %v45 = vperm.slane %v43, 0
  %47 = vmatpush.msra.mxu0 %v42
  %48 = vmatpush.msra.mxu0 %v41
  %49 = vmatpush.msra.mxu0 %v40
  %50 = vmatpush.msra.mxu0 %v39
  %51 = vmatpush.msra.mxu0 %v38
  %52 = vmatpush.msra.mxu0 %v37
  %53 = vmatpush.msra.mxu0 %v36
  %54 = vmatpush.msra.mxu0 %v35
  %55 = vmatpush.msra.mxu0 %v34
  %56 = vmatpush.msra.mxu0 %v33
  %57 = vmatpush.msra.mxu0 %v32
  %58 = vmatpush.msra.mxu0 %v31
  %59 = vmatpush.msra.mxu0 %v30
  %60 = vmatpush.msra.mxu0 %v29
  %61 = vmatpush.msra.mxu0 %v28
  %62 = vmatpush.msra.mxu0 %v27
  %63 = vmatmul.f32.gmra.mxu0 %v26
  %v64 = vpop.f32.mrf.mxu0
  %v65 = vadd.f32 %v45, %v64
  %66 = vdwg.mxu0
  %v67 = vmax.f32 %v65, 0.0
  %v68 = vld [vmem:[%s3] sm:$0xff]
  %v69 = vld [vmem:[%s3 + $0x8] sm:$0xff]
  %v70 = vld [vmem:[%s3 + $0x10] sm:$0xff]
  %v71 = vld [vmem:[%s3 + $0x18] sm:$0xff]
  %v72 = vld [vmem:[%s3 + $0x20] sm:$0xff]
  %v73 = vld [vmem:[%s3 + $0x28] sm:$0xff]
  %v74 = vld [vmem:[%s3 + $0x30] sm:$0xff]
  %v75 = vld [vmem:[%s3 + $0x38] sm:$0xff]
  %v76 = vld [vmem:[%s4] sm:$0x1]
  %v78 = vperm.slane %v76, 0
  %vm80 = vcmask 523264
  %v82 = vsel %vm80, %v67, 0
  %84 = vmatpush.msra.mxu0 0.0
  %85 = vmatpush.msra.mxu0 0.0
  %86 = vmatpush.msra.mxu0 0.0
  %87 = vmatpush.msra.mxu0 0.0
  %88 = vmatpush.msra.mxu0 0.0
  %89 = vmatpush.msra.mxu0 0.0
  %90 = vmatpush.msra.mxu0 0.0
  %91 = vmatpush.msra.mxu0 0.0
  %92 = vmatpush.msra.mxu0 %v75
  %93 = vmatpush.msra.mxu0 %v74
  %94 = vmatpush.msra.mxu0 %v73
  %95 = vmatpush.msra.mxu0 %v72
  %96 = vmatpush.msra.mxu0 %v71
  %97 = vmatpush.msra.mxu0 %v70
  %98 = vmatpush.msra.mxu0 %v69
  %99 = vmatpush.msra.mxu0 %v68
  %100 = vmatmul.f32.gmra.mxu0 %v82
  %v101 = vpop.f32.mrf.mxu0
  %v102 = vadd.f32 %v78, %v101
  %103 = vdwg.mxu0
  %v104 = vmax.f32 %v102, 0.0
  %v105 = vld [vmem:[%s5] sm:$0xff]
  %v106 = vld [vmem:[%s5 + $0x8] sm:$0xff]
  %v107 = vld [vmem:[%s5 + $0x10] sm:$0xff]
  %v108 = vld [vmem:[%s5 + $0x18] sm:$0xff]
  %v109 = vld [vmem:[%s6] sm:$0x1]
  %v111 = vperm.slane %v109, 0
  %vm113 = vcmask 261120
  %v115 = vsel %vm113, %v104, 0
  %117 = vmatpush.msra.mxu0 0.0
  %118 = vmatpush.msra.mxu0 0.0
  %119 = vmatpush.msra.mxu0 0.0
  %120 = vmatpush.msra.mxu0 0.0
  %121 = vmatpush.msra.mxu0 0.0
  %122 = vmatpush.msra.mxu0 0.0
  %123 = vmatpush.msra.mxu0 0.0
  %124 = vmatpush.msra.mxu0 0.0
  %125 = vmatpush.msra.mxu0 0.0
  %126 = vmatpush.msra.mxu0 0.0
  %127 = vmatpush.msra.mxu0 0.0
  %128 = vmatpush.msra.mxu0 0.0
  %129 = vmatpush.msra.mxu0 %v108
  %130 = vmatpush.msra.mxu0 %v107
  %131 = vmatpush.msra.mxu0 %v106
  %132 = vmatpush.msra.mxu0 %v105
  %133 = vmatmul.f32.gmra.mxu0 %v115
  %v134 = vpop.f32.mrf.mxu0
  %v135 = vadd.f32 %v111, %v134
  %136 = vdwg.mxu0
  %vm137 = vcmask 31744
  %138 = vst.msk [vmem:[%s7] sm:$0xff] %vm137, %v135
  // Predicated region
  $region30: #{tpu_custom_call.1} parent=0 // pred_check
    _
  $region31: #{tpu_custom_call.1} parent=0 // pred_check_branch
    %140 = sbr.rel (0) target = $region33
  $region32: #{tpu_custom_call.1} parent=0 // pred_region
    _
  $region33: #{tpu_custom_call.1} parent=0 // pred_fallthru
    _
  // Predicated region
  $region34: #{tpu_custom_call.1} parent=0 // pred_check
    _
  $region35: #{tpu_custom_call.1} parent=0 // pred_check_branch
    %142 = sbr.rel (0) target = $region37
  $region36: #{tpu_custom_call.1} parent=0 // pred_region
    _
  $region37: #{tpu_custom_call.1} parent=0 // pred_fallthru
    _

</llo_original>
